<compile_context>
chip_gen: v7x
topology: tpu7x:2x2x1
jax: 0.10.0
libtpu: 0.0.40
codegen_flags: <defaults>
</compile_context>

<pallas_src>
import jax
import jax.numpy as jnp
from jax import lax
from jax.experimental import pallas as pl
from jax.experimental.pallas import tpu as pltpu


def _elu(x):
    # F.elu with alpha=1 (min() keeps exp() safe on the unselected branch)
    return jnp.where(x > 0, x, jnp.exp(jnp.minimum(x, 0.0)) - 1.0)


# ---------------------------------------------------------------------------
# Kernel A: cell embedding MLP fused with the gene-invariant fc1 partial
#   A = (Linear2(ELU(Linear1(ctrl)))) @ W1_cell + (b1 + N * w1_numcells)
# Tiled over cells (N); all weights use constant BlockSpecs.
# ---------------------------------------------------------------------------
def cell_embed_fc1_kernel(ctrl_ref, wc1_ref, bc1_ref, wc2_ref, bc2_ref,
                          w1cell_ref, abias_ref, a_ref):
    h = jnp.dot(ctrl_ref[...], wc1_ref[...],
                preferred_element_type=jnp.float32) + bc1_ref[...]
    h = _elu(h)
    ce = jnp.dot(h, wc2_ref[...],
                 preferred_element_type=jnp.float32) + bc2_ref[...]
    a_ref[...] = jnp.dot(ce, w1cell_ref[...],
                         preferred_element_type=jnp.float32) + abias_ref[...]


def cell_embed_fc1(ctrl, Wc1, bc1, Wc2, bc2, W1cell, abias):
    N, G = ctrl.shape
    Hc = Wc1.shape[1]
    C = Wc2.shape[1]
    H = W1cell.shape[1]
    tn = min(N, 128)
    const = lambda i: (0, 0)
    return pl.pallas_call(
        cell_embed_fc1_kernel,
        out_shape=jax.ShapeDtypeStruct((N, H), jnp.float32),
        grid_spec=pltpu.PrefetchScalarGridSpec(
            num_scalar_prefetch=0,
            grid=(pl.cdiv(N, tn),),
            in_specs=[
                pl.BlockSpec((tn, G), lambda i: (i, 0)),   # ctrl tile (native layout)
                pl.BlockSpec((G, Hc), const),
                pl.BlockSpec((1, Hc), const),
                pl.BlockSpec((Hc, C), const),
                pl.BlockSpec((1, C), const),
                pl.BlockSpec((C, H), const),
                pl.BlockSpec((1, H), const),
            ],
            out_specs=pl.BlockSpec((tn, H), lambda i: (i, 0)),
        ),
        compiler_params=pltpu.CompilerParams(
            dimension_semantics=("parallel",),
            vmem_limit_bytes=64 * 1024 * 1024,
        ),
    )(ctrl, Wc1, bc1.reshape(1, Hc), Wc2, bc2.reshape(1, C), W1cell, abias)


# ---------------------------------------------------------------------------
# Kernel B: per-gene FCGNN over a gene block + softmax over cells.
# Layouts: all heavy 3-D tensors are (N or K leading, H/K sublane, TG lane).
#   ctrl_ref : (N, TG)    native ctrl block
#   a_ref    : (N, H)     gene-invariant fc1 partial (cell_embed/num_cells/b1)
#   b_ref    : (H, TG)    gene-side fc1 partial (gene_embed/shift), pre-transposed
#   w2_ref   : (2H, H)    [W2_top^T ; W2_bottom^T]
#   small_ref: (H, 8)     columns: [w1_ctrl, b2, w3_top, w3_bottom, b3@[0,4], 0..]
# ---------------------------------------------------------------------------
def gnn_softmax_kernel(ctrl_ref, a_ref, b_ref, w2_ref, small_ref, out_ref):
    n_cells, hdim = a_ref.shape
    inv_n = 1.0 / n_cells

    w1c = small_ref[:, 0:1]          # (H, 1)
    b2c = small_ref[:, 1:2]          # (H, 1)
    w3t = small_ref[:, 2:3]          # (H, 1)
    w3b = small_ref[:, 3:4]          # (H, 1)
    b3 = small_ref[0:1, 4:5]         # (1, 1)

    # fc1 (decomposed over the concat [ctrl | cell_emb | gene_emb | shift | N]):
    #   h1[n,h,g] = A[n,h] + B[h,g] + ctrl[n,g] * w1c[h]
    h1 = (a_ref[...][:, :, None]
          + b_ref[...][None, :, :]
          + ctrl_ref[...][:, None, :] * w1c[None, :, :])        # (N, H, TG)
    x1 = _elu(h1)
    pooled1 = jnp.sum(x1, axis=0) * inv_n                       # (H, TG)

    # fc2 on concat([x1, pooled1]); weight split into top/bottom halves.
    w2t_t = w2_ref[:hdim, :]                                    # (K, H) = W2[:H].T
    w2b_t = w2_ref[hdim:, :]                                    # (K, H) = W2[H:].T
    w2t_b = jnp.broadcast_to(w2t_t[None, :, :], (n_cells, hdim, hdim))
    # batched MXU contraction over H: (N,K,H) x (N,H,TG) -> (N,K,TG)
    h2 = lax.dot_general(w2t_b, x1,
                         dimension_numbers=(((2,), (1,)), ((0,), (0,))),
                         preferred_element_type=jnp.float32)
    cvec = jnp.dot(w2b_t, pooled1,
                   preferred_element_type=jnp.float32) + b2c    # (K, TG)
    h2 = h2 + cvec[None, :, :]                                  # (N, K, TG)

    pooled2 = jnp.sum(h2, axis=0) * inv_n                       # (K, TG)

    # ELU on concat([h2, pooled2]) then fc3 (out_dim = 1).
    logits = jnp.sum(_elu(h2) * w3t[None, :, :], axis=1)        # (N, TG)
    gene_const = (jnp.sum(_elu(pooled2) * w3b, axis=0, keepdims=True)
                  + b3)                                         # (1, TG)
    logits = logits + gene_const

    # softmax over cells (dim 0), per gene column; reciprocal-multiply normalize.
    m = jnp.max(logits, axis=0, keepdims=True)
    e = jnp.exp(logits - m)
    s = jnp.sum(e, axis=0, keepdims=True)
    out_ref[...] = e * pl.reciprocal(s, approx=False)


def scot_forward(ctrl, shift_vec, params, tg=128):
    """SCOT.forward: returns weighted_dist of shape (N, G) (softmax over cells)."""
    N, G = ctrl.shape
    gene_emb = params["gene_embedding"]                          # (G, E)
    E = gene_emb.shape[1]
    C = params["Wc2"].shape[1]
    W1, W2, W3 = params["W1"], params["W2"], params["W3"]
    H = W1.shape[1]

    # Split the fc1 weight by feature block (concat order in the module).
    w1c_row = W1[0]                    # ctrl coefficient          (H,)
    w1cell = W1[1:1 + C]               # cell-embedding block      (C, H)
    w1gene = W1[1 + C:1 + C + E]       # gene-embedding block      (E, H)
    w1s_row = W1[1 + C + E]            # shift coefficient         (H,)
    w1n_row = W1[2 + C + E]            # num_cells coefficient     (H,)

    # Gene-invariant fc1 partial, hoisted out of the gene grid (Pallas kernel A).
    abias = (params["b1"] + float(N) * w1n_row).reshape(1, H)
    A = cell_embed_fc1(ctrl, params["Wc1"], params["bc1"],
                       params["Wc2"], params["bc2"], w1cell, abias)   # (N, H)

    # Cell-invariant fc1 partial (tiny (G,H) weight-side precompute), stored
    # transposed so the kernel block (H, TG) is lane-dense with no in-kernel
    # transpose.
    B = (gene_emb @ w1gene + shift_vec[:, None] * w1s_row[None, :]).T  # (H, G)

    # Pack fc2 halves and all tiny per-hidden weights into two operands.
    w2pack = jnp.concatenate([W2[:H].T, W2[H:].T], axis=0)       # (2H, H)
    small = jnp.zeros((H, 8), jnp.float32)
    small = small.at[:, 0].set(w1c_row)
    small = small.at[:, 1].set(params["b2"])
    small = small.at[:, 2].set(W3[:H, 0])
    small = small.at[:, 3].set(W3[H:, 0])
    small = small.at[0, 4].set(params["b3"][0])

    tg = min(tg, G)
    const = lambda g: (0, 0)

    return pl.pallas_call(
        gnn_softmax_kernel,
        out_shape=jax.ShapeDtypeStruct((N, G), jnp.float32),
        grid_spec=pltpu.PrefetchScalarGridSpec(
            num_scalar_prefetch=0,
            grid=(pl.cdiv(G, tg),),
            in_specs=[
                pl.BlockSpec((N, tg), lambda g: (0, g)),   # ctrl block (native)
                pl.BlockSpec((N, H), const),               # fc1 cell-side partial
                pl.BlockSpec((H, tg), lambda g: (0, g)),   # fc1 gene-side partial
                pl.BlockSpec((2 * H, H), const),           # [W2_top^T ; W2_bot^T]
                pl.BlockSpec((H, 8), const),               # packed small weights
            ],
            out_specs=pl.BlockSpec((N, tg), lambda g: (0, g)),
        ),
        compiler_params=pltpu.CompilerParams(
            dimension_semantics=("parallel",),
            vmem_limit_bytes=64 * 1024 * 1024,
        ),
    )(ctrl, A, B, w2pack, small)


# ---------------------------------------------------------------------------
# Pure-JAX reference (mirrors the PyTorch forward exactly) for validation.
# ---------------------------------------------------------------------------
def reference_forward(ctrl, shift_vec, params):
    N, G = ctrl.shape
    h = _elu(ctrl @ params["Wc1"] + params["bc1"])
    cell_embed = h @ params["Wc2"] + params["bc2"]
    gene_emb = params["gene_embedding"]
    feats = jnp.concatenate(
        [
            ctrl[:, :, None],
            jnp.tile(cell_embed[:, None, :], (1, G, 1)),
            jnp.tile(gene_emb[None, :, :], (N, 1, 1)),
            jnp.tile(shift_vec[None, :, None], (N, 1, 1)),
            jnp.full((N, G, 1), float(N), jnp.float32),
        ],
        axis=2,
    )
    W1, b1 = params["W1"], params["b1"]
    W2, b2 = params["W2"], params["b2"]
    W3, b3 = params["W3"], params["b3"]

    def gnn(z):  # z: (N, D_in)
        x = _elu(z @ W1 + b1)
        pooled = jnp.tile(x.mean(axis=0)[None, :], (z.shape[0], 1))
        x = jnp.concatenate([x, pooled], axis=1) @ W2 + b2
        pooled = jnp.tile(x.mean(axis=0)[None, :], (z.shape[0], 1))
        x = _elu(jnp.concatenate([x, pooled], axis=1))
        return x @ W3 + b3

    out = jax.vmap(gnn, in_axes=1)(feats)            # (G, N, 1)
    out = jnp.transpose(out, (1, 0, 2))[:, :, 0]     # (N, G)
    return jax.nn.softmax(out, axis=0)


# TODO(synk): the training loop, dataloader and the POT sliced-Wasserstein loss
# (random projections + per-column sort) are not part of the forward pass and
# are left out of the kernels.

if __name__ == "__main__":
    key = jax.random.PRNGKey(0)
    N, G, H, C, E = 8, 256, 32, 16, 16        # cells, genes, hidden, cell_emb, gene_emb
    D_in = E + C + 3
    keys = jax.random.split(key, 13)

    params = {
        "Wc1": jax.random.normal(keys[0], (G, H), jnp.float32) * 0.05,
        "bc1": jax.random.normal(keys[1], (H,), jnp.float32) * 0.01,
        "Wc2": jax.random.normal(keys[2], (H, C), jnp.float32) * 0.05,
        "bc2": jax.random.normal(keys[3], (C,), jnp.float32) * 0.01,
        "gene_embedding": jax.random.normal(keys[4], (G, E), jnp.float32) * 0.1,
        "W1": jax.random.normal(keys[5], (D_in, H), jnp.float32) * 0.05,
        "b1": jax.random.normal(keys[6], (H,), jnp.float32) * 0.01,
        "W2": jax.random.normal(keys[7], (2 * H, H), jnp.float32) * 0.05,
        "b2": jax.random.normal(keys[8], (H,), jnp.float32) * 0.01,
        "W3": jax.random.normal(keys[9], (2 * H, 1), jnp.float32) * 0.05,
        "b3": jax.random.normal(keys[10], (1,), jnp.float32) * 0.01,
    }

    ctrl = jax.random.uniform(keys[11], (N, G), jnp.float32)
    shift_vec = jax.random.normal(keys[12], (G,), jnp.float32)

    out = scot_forward(ctrl, shift_vec, params)
    out = jax.block_until_ready(out)

    ref = reference_forward(ctrl, shift_vec, params)
    assert out.shape == (N, G)
    if not bool(jnp.allclose(out, ref, atol=2e-5, rtol=2e-4)):
        max_err = float(jnp.max(jnp.abs(out - ref)))
        raise AssertionError(f"Pallas/JAX mismatch, max abs err = {max_err}")

    print("KERNEL_OK")
</pallas_src>

<mosaic_0001>
module attributes {stable_mosaic.version = 11 : i64} {
  func.func @cell_embed_fc1_kernel(%arg0: i32, %arg1: memref<8x256xf32, #tpu.memory_space<vmem>>, %arg2: memref<256x32xf32, #tpu.memory_space<vmem>>, %arg3: memref<1x32xf32, #tpu.memory_space<vmem>>, %arg4: memref<32x16xf32, #tpu.memory_space<vmem>>, %arg5: memref<1x16xf32, #tpu.memory_space<vmem>>, %arg6: memref<16x32xf32, #tpu.memory_space<vmem>>, %arg7: memref<1x32xf32, #tpu.memory_space<vmem>>, %arg8: memref<8x32xf32, #tpu.memory_space<vmem>>) attributes {dimension_semantics = [#tpu.dimension_semantics<parallel>], iteration_bounds = array<i64: 1>, scalar_prefetch = 0 : i64, scratch_operands = 0 : i64, tpu.core_type = #tpu.core_type<tc>, window_params = [{transform_indices = @transform_0, window_bounds = array<i64: 8, 256>}, {pipeline_mode = #tpu.pipeline_mode<synchronous>, transform_indices = @transform_1, window_bounds = array<i64: 256, 32>}, {pipeline_mode = #tpu.pipeline_mode<synchronous>, transform_indices = @transform_2, window_bounds = array<i64: 1, 32>}, {pipeline_mode = #tpu.pipeline_mode<synchronous>, transform_indices = @transform_3, window_bounds = array<i64: 32, 16>}, {pipeline_mode = #tpu.pipeline_mode<synchronous>, transform_indices = @transform_4, window_bounds = array<i64: 1, 16>}, {pipeline_mode = #tpu.pipeline_mode<synchronous>, transform_indices = @transform_5, window_bounds = array<i64: 16, 32>}, {pipeline_mode = #tpu.pipeline_mode<synchronous>, transform_indices = @transform_6, window_bounds = array<i64: 1, 32>}, {transform_indices = @transform_7, window_bounds = array<i64: 8, 32>}]} {
    %c0 = arith.constant 0 : index
    %c0_0 = arith.constant 0 : index
    %0 = vector.load %arg1[%c0, %c0_0] : memref<8x256xf32, #tpu.memory_space<vmem>>, vector<8x256xf32>
    %c0_1 = arith.constant 0 : index
    %c0_2 = arith.constant 0 : index
    %1 = vector.load %arg2[%c0_1, %c0_2] : memref<256x32xf32, #tpu.memory_space<vmem>>, vector<256x32xf32>
    %cst = arith.constant dense<0.000000e+00> : vector<8x32xf32>
    %2 = tpu.matmul %0, %1, %cst {dimension_numbers = #tpu.dot_dimension_numbers<[1], [0], [0], [1], [0, 0, 1, 1], [], []>} : vector<8x256xf32>, vector<256x32xf32>, vector<8x32xf32> -> vector<8x32xf32>
    %c0_3 = arith.constant 0 : index
    %c0_4 = arith.constant 0 : index
    %3 = vector.load %arg3[%c0_3, %c0_4] : memref<1x32xf32, #tpu.memory_space<vmem>>, vector<1x32xf32>
    %4 = vector.broadcast %3 : vector<1x32xf32> to vector<8x32xf32>
    %5 = arith.addf %2, %4 : vector<8x32xf32>
    %cst_5 = arith.constant 0.000000e+00 : f32
    %6 = vector.broadcast %cst_5 : f32 to vector<8x32xf32>
    %7 = arith.cmpf ogt, %5, %6 : vector<8x32xf32>
    %cst_6 = arith.constant 0.000000e+00 : f32
    %8 = vector.broadcast %cst_6 : f32 to vector<8x32xf32>
    %9 = arith.minimumf %5, %8 : vector<8x32xf32>
    %10 = math.exp %9 : vector<8x32xf32>
    %cst_7 = arith.constant 1.000000e+00 : f32
    %11 = vector.broadcast %cst_7 : f32 to vector<8x32xf32>
    %12 = arith.subf %10, %11 : vector<8x32xf32>
    %13 = arith.select %7, %5, %12 : vector<8x32xi1>, vector<8x32xf32>
    %c0_8 = arith.constant 0 : index
    %c0_9 = arith.constant 0 : index
    %14 = vector.load %arg4[%c0_8, %c0_9] : memref<32x16xf32, #tpu.memory_space<vmem>>, vector<32x16xf32>
    %cst_10 = arith.constant dense<0.000000e+00> : vector<8x16xf32>
    %15 = tpu.matmul %13, %14, %cst_10 {dimension_numbers = #tpu.dot_dimension_numbers<[1], [0], [0], [1], [0, 0, 1, 1], [], []>} : vector<8x32xf32>, vector<32x16xf32>, vector<8x16xf32> -> vector<8x16xf32>
    %c0_11 = arith.constant 0 : index
    %c0_12 = arith.constant 0 : index
    %16 = vector.load %arg5[%c0_11, %c0_12] : memref<1x16xf32, #tpu.memory_space<vmem>>, vector<1x16xf32>
    %17 = vector.broadcast %16 : vector<1x16xf32> to vector<8x16xf32>
    %18 = arith.addf %15, %17 : vector<8x16xf32>
    %c0_13 = arith.constant 0 : index
    %c0_14 = arith.constant 0 : index
    %19 = vector.load %arg6[%c0_13, %c0_14] : memref<16x32xf32, #tpu.memory_space<vmem>>, vector<16x32xf32>
    %cst_15 = arith.constant dense<0.000000e+00> : vector<8x32xf32>
    %20 = tpu.matmul %18, %19, %cst_15 {dimension_numbers = #tpu.dot_dimension_numbers<[1], [0], [0], [1], [0, 0, 1, 1], [], []>} : vector<8x16xf32>, vector<16x32xf32>, vector<8x32xf32> -> vector<8x32xf32>
    %c0_16 = arith.constant 0 : index
    %c0_17 = arith.constant 0 : index
    %21 = vector.load %arg7[%c0_16, %c0_17] : memref<1x32xf32, #tpu.memory_space<vmem>>, vector<1x32xf32>
    %22 = vector.broadcast %21 : vector<1x32xf32> to vector<8x32xf32>
    %23 = arith.addf %20, %22 : vector<8x32xf32>
    %c0_18 = arith.constant 0 : index
    %c0_19 = arith.constant 0 : index
    %24 = vector.load %arg8[%c0_18, %c0_19] : memref<8x32xf32, #tpu.memory_space<vmem>>, vector<8x32xf32>
    tpu.vector_store %arg8[%c0_18, %c0_19], %23 {strides = array<i32>} : memref<8x32xf32, #tpu.memory_space<vmem>>, vector<8x32xf32>,
    return
  }
  func.func @transform_0(%arg0: i32) -> (i32, i32) {
    %c0_i32 = arith.constant 0 : i32
    %c0_i32_0 = arith.constant 0 : i32
    return %arg0, %c0_i32 : i32, i32
  }
  func.func @transform_1(%arg0: i32) -> (i32, i32) {
    %c0_i32 = arith.constant 0 : i32
    %c0_i32_0 = arith.constant 0 : i32
    %c0_i32_1 = arith.constant 0 : i32
    return %c0_i32, %c0_i32_0 : i32, i32
  }
  func.func @transform_2(%arg0: i32) -> (i32, i32) {
    %c0_i32 = arith.constant 0 : i32
    %c0_i32_0 = arith.constant 0 : i32
    %c0_i32_1 = arith.constant 0 : i32
    return %c0_i32, %c0_i32_0 : i32, i32
  }
  func.func @transform_3(%arg0: i32) -> (i32, i32) {
    %c0_i32 = arith.constant 0 : i32
    %c0_i32_0 = arith.constant 0 : i32
    %c0_i32_1 = arith.constant 0 : i32
    return %c0_i32, %c0_i32_0 : i32, i32
  }
  func.func @transform_4(%arg0: i32) -> (i32, i32) {
    %c0_i32 = arith.constant 0 : i32
    %c0_i32_0 = arith.constant 0 : i32
    %c0_i32_1 = arith.constant 0 : i32
    return %c0_i32, %c0_i32_0 : i32, i32
  }
  func.func @transform_5(%arg0: i32) -> (i32, i32) {
    %c0_i32 = arith.constant 0 : i32
    %c0_i32_0 = arith.constant 0 : i32
    %c0_i32_1 = arith.constant 0 : i32
    return %c0_i32, %c0_i32_0 : i32, i32
  }
  func.func @transform_6(%arg0: i32) -> (i32, i32) {
    %c0_i32 = arith.constant 0 : i32
    %c0_i32_0 = arith.constant 0 : i32
    %c0_i32_1 = arith.constant 0 : i32
    return %c0_i32, %c0_i32_0 : i32, i32
  }
  func.func @transform_7(%arg0: i32) -> (i32, i32) {
    %c0_i32 = arith.constant 0 : i32
    %c0_i32_0 = arith.constant 0 : i32
    return %arg0, %c0_i32 : i32, i32
  }
}

</mosaic_0001>

<llo_original>
// kernel: tpu_custom_call.1
$region0: #{tpu_custom_call.1}
  #allocation0 [shape = 'u32[]', space=smem, size = 0x4, offset = 0x4, fixed_abs, tag = 'smem constant byte address 0x4 - core index']
  #allocation1 [shape = 'u32[144,128]{1,0:T(1,128)}', space=vmem, size = 0x12000, scoped, tag = 'internal scratch']
  %s0 = inlined_call_operand.hbm [shape: f32[8,256], index: 0, kind: input, shape index: {}]
  %s1 = inlined_call_operand.hbm [shape: f32[256,32], index: 1, kind: input, shape index: {}]
  %s2 = inlined_call_operand.hbm [shape: f32[1,32], index: 2, kind: input, shape index: {}]
  %s3 = inlined_call_operand.hbm [shape: f32[32,16], index: 3, kind: input, shape index: {}]
  %s4 = inlined_call_operand.hbm [shape: f32[1,16], index: 4, kind: input, shape index: {}]
  %s5 = inlined_call_operand.hbm [shape: f32[16,32], index: 5, kind: input, shape index: {}]
  %s6 = inlined_call_operand.hbm [shape: f32[1,32], index: 6, kind: input, shape index: {}]
  %s7 = inlined_call_operand.hbm [shape: f32[8,32], index: 7, kind: output, shape index: {}]
  %s8 = sld [smem:[#allocation0]]
  $region66: #{tpu_custom_call.1} parent=0
    _
  %s10 = ssub.s32 1, %s8
  %s11 = scalar_select 0, %s10, %s8
  $region1: #{tpu_custom_call.1} parent=0
    #allocation2 [shape = 'u8[8192]{0}', space=vmem, size = 0x2000, scoped, tag = 'input window, operand 0, single buffered']
    #allocation3 [shape = 's32[1]{0}', space=sflag, size = 0x4, scoped, tag = 'scoped memory for tpu_custom_call.1']
    #allocation4 [shape = 's32[1]{0}', space=sflag, size = 0x4, scoped, tag = 'scoped memory for tpu_custom_call.1']
    #allocation5 [shape = 'u8[131072]{0}', space=vmem, size = 0x20000, scoped, tag = 'input window, operand 1, single buffered']
    #allocation6 [shape = 's32[1]{0}', space=sflag, size = 0x4, scoped, tag = 'scoped memory for tpu_custom_call.1']
    #allocation7 [shape = 'u8[512]{0}', space=vmem, size = 0x400, scoped, tag = 'input window, operand 2, single buffered']
    #allocation8 [shape = 'u8[16384]{0}', space=vmem, size = 0x4000, scoped, tag = 'input window, operand 3, single buffered']
    #allocation9 [shape = 's32[1]{0}', space=sflag, size = 0x4, scoped, tag = 'scoped memory for tpu_custom_call.1']
    #allocation10 [shape = 'u8[512]{0}', space=vmem, size = 0x400, scoped, tag = 'input window, operand 4, single buffered']
    #allocation11 [shape = 'u8[8192]{0}', space=vmem, size = 0x2000, scoped, tag = 'input window, operand 5, single buffered']
    #allocation12 [shape = 's32[1]{0}', space=sflag, size = 0x4, scoped, tag = 'scoped memory for tpu_custom_call.1']
    #allocation13 [shape = 'u8[512]{0}', space=vmem, size = 0x400, scoped, tag = 'input window, operand 6, single buffered']
    #allocation14 [shape = 'u8[4096]{0}', space=vmem, size = 0x1000, scoped, tag = 'output window, operand 0, single buffered']
    %12 = vsyncpa [#allocation3], 0
    %13 = vsyncpa [#allocation6], 0
    %14 = vsyncpa [#allocation9], 0
    %15 = vsyncpa [#allocation12], 0
    %16 = vsyncpa [#allocation4], 0
    // Predicated region
    $region2: #{tpu_custom_call.1} parent=1 // pred_check
      _
    $region3: #{tpu_custom_call.1} parent=1 // pred_check_branch
      %18 = sbr.rel (0) target = $region5
    $region4: #{tpu_custom_call.1} parent=1 // pred_region
      %s20 = ssub.s32 256, 256
      %21 = vsyncadd [#allocation3], %s20
      %s23 = sshll.u32 [#allocation2], 4
      %s24 = int_to_ptr.vmem [resolvable:$true] %s23
      %26 = dma.hbm_to_vmem [thread:$0]  %s0, 256, %s24, [#allocation3]
    $region5: #{tpu_custom_call.1} parent=1 // pred_fallthru
      _
    // Predicated region
    $region6: #{tpu_custom_call.1} parent=1 // pred_check
      _
    $region7: #{tpu_custom_call.1} parent=1 // pred_check_branch
      %28 = sbr.rel (0) target = $region9
    $region8: #{tpu_custom_call.1} parent=1 // pred_region
      %s30 = ssub.s32 4096, 4096
      %31 = vsyncadd [#allocation6], %s30
      %s32 = sshll.u32 [#allocation5], 4
      %s33 = int_to_ptr.vmem [resolvable:$true] %s32
      %38 = dma.hbm_to_vmem [thread:$0]  %s1, 4096, %s33, [#allocation6], 128, 128, 8
    $region9: #{tpu_custom_call.1} parent=1 // pred_fallthru
      _
    // Predicated region
    $region10: #{tpu_custom_call.1} parent=1 // pred_check
      _
    $region11: #{tpu_custom_call.1} parent=1 // pred_check_branch
      %40 = sbr.rel (0) target = $region13
    $region12: #{tpu_custom_call.1} parent=1 // pred_region
      %s42 = ssub.s32 16, 16
      %43 = vsyncadd [#allocation6], %s42
      %s45 = sshll.u32 [#allocation7], 4
      %s46 = int_to_ptr.vmem [resolvable:$true] %s45
      %48 = dma.hbm_to_vmem [thread:$0]  %s2, 16, %s46, [#allocation6]
    $region13: #{tpu_custom_call.1} parent=1 // pred_fallthru
      _
    // Predicated region
    $region14: #{tpu_custom_call.1} parent=1 // pred_check
      _
    $region15: #{tpu_custom_call.1} parent=1 // pred_check_branch
      %50 = sbr.rel (0) target = $region17
    $region16: #{tpu_custom_call.1} parent=1 // pred_region
      %s52 = ssub.s32 512, 512
      %53 = vsyncadd [#allocation9], %s52
      %s54 = sshll.u32 [#allocation8], 4
      %s55 = int_to_ptr.vmem [resolvable:$true] %s54
      %60 = dma.hbm_to_vmem [thread:$0]  %s3, 512, %s55, [#allocation9], 128, 128, 8
    $region17: #{tpu_custom_call.1} parent=1 // pred_fallthru
      _
    // Predicated region
    $region18: #{tpu_custom_call.1} parent=1 // pred_check
      _
    $region19: #{tpu_custom_call.1} parent=1 // pred_check_branch
      %62 = sbr.rel (0) target = $region21
    $region20: #{tpu_custom_call.1} parent=1 // pred_region
      %s64 = ssub.s32 16, 16
      %65 = vsyncadd [#allocation9], %s64
      %s67 = sshll.u32 [#allocation10], 4
      %s68 = int_to_ptr.vmem [resolvable:$true] %s67
      %70 = dma.hbm_to_vmem [thread:$0]  %s4, 16, %s68, [#allocation9]
    $region21: #{tpu_custom_call.1} parent=1 // pred_fallthru
      _
    // Predicated region
    $region22: #{tpu_custom_call.1} parent=1 // pred_check
      _
    $region23: #{tpu_custom_call.1} parent=1 // pred_check_branch
      %72 = sbr.rel (0) target = $region25
    $region24: #{tpu_custom_call.1} parent=1 // pred_region
      %s74 = ssub.s32 256, 256
      %75 = vsyncadd [#allocation12], %s74
      %s76 = sshll.u32 [#allocation11], 4
      %s77 = int_to_ptr.vmem [resolvable:$true] %s76
      %82 = dma.hbm_to_vmem [thread:$0]  %s5, 256, %s77, [#allocation12], 128, 128, 8
    $region25: #{tpu_custom_call.1} parent=1 // pred_fallthru
      _
    // Predicated region
    $region26: #{tpu_custom_call.1} parent=1 // pred_check
      _
    $region27: #{tpu_custom_call.1} parent=1 // pred_check_branch
      %84 = sbr.rel (0) target = $region29
    $region28: #{tpu_custom_call.1} parent=1 // pred_region
      %s86 = ssub.s32 16, 16
      %87 = vsyncadd [#allocation12], %s86
      %s89 = sshll.u32 [#allocation13], 4
      %s90 = int_to_ptr.vmem [resolvable:$true] %s89
      %92 = dma.hbm_to_vmem [thread:$0]  %s6, 16, %s90, [#allocation12]
    $region29: #{tpu_custom_call.1} parent=1 // pred_fallthru
      _
    // Predicated region
    $region30: #{tpu_custom_call.1} parent=1 // pred_check
      _
    $region31: #{tpu_custom_call.1} parent=1 // pred_check_branch
      %94 = sbr.rel (0) target = $region33
    $region32: #{tpu_custom_call.1} parent=1 // pred_region
      %95 = dma.done [#allocation3], 256
    $region33: #{tpu_custom_call.1} parent=1 // pred_fallthru
      _
    // Predicated region
    $region34: #{tpu_custom_call.1} parent=1 // pred_check
      _
    $region35: #{tpu_custom_call.1} parent=1 // pred_check_branch
      %97 = sbr.rel (0) target = $region37
    $region36: #{tpu_custom_call.1} parent=1 // pred_region
      %98 = dma.done [#allocation6], 4096
    $region37: #{tpu_custom_call.1} parent=1 // pred_fallthru
      _
    // Predicated region
    $region38: #{tpu_custom_call.1} parent=1 // pred_check
      _
    $region39: #{tpu_custom_call.1} parent=1 // pred_check_branch
      %100 = sbr.rel (0) target = $region41
    $region40: #{tpu_custom_call.1} parent=1 // pred_region
      %101 = dma.done [#allocation6], 16
    $region41: #{tpu_custom_call.1} parent=1 // pred_fallthru
      _
    // Predicated region
    $region42: #{tpu_custom_call.1} parent=1 // pred_check
      _
    $region43: #{tpu_custom_call.1} parent=1 // pred_check_branch
      %103 = sbr.rel (0) target = $region45
    $region44: #{tpu_custom_call.1} parent=1 // pred_region
      %104 = dma.done [#allocation9], 512
    $region45: #{tpu_custom_call.1} parent=1 // pred_fallthru
      _
    // Predicated region
    $region46: #{tpu_custom_call.1} parent=1 // pred_check
      _
    $region47: #{tpu_custom_call.1} parent=1 // pred_check_branch
      %106 = sbr.rel (0) target = $region49
    $region48: #{tpu_custom_call.1} parent=1 // pred_region
      %107 = dma.done [#allocation9], 16
    $region49: #{tpu_custom_call.1} parent=1 // pred_fallthru
      _
    // Predicated region
    $region50: #{tpu_custom_call.1} parent=1 // pred_check
      _
    $region51: #{tpu_custom_call.1} parent=1 // pred_check_branch
      %109 = sbr.rel (0) target = $region53
    $region52: #{tpu_custom_call.1} parent=1 // pred_region
      %110 = dma.done [#allocation12], 256
    $region53: #{tpu_custom_call.1} parent=1 // pred_fallthru
      _
    // Predicated region
    $region54: #{tpu_custom_call.1} parent=1 // pred_check
      _
    $region55: #{tpu_custom_call.1} parent=1 // pred_check_branch
      %112 = sbr.rel (0) target = $region57
    $region56: #{tpu_custom_call.1} parent=1 // pred_region
      %113 = dma.done [#allocation12], 16
    $region57: #{tpu_custom_call.1} parent=1 // pred_fallthru
      _
    %v114 = vld [vmem:[#allocation2] sm:$0xff]
    %v115 = vld [vmem:[#allocation2 + $0x8] sm:$0xff]
    %v116 = vld [vmem:[#allocation5] sm:$0xff]
    %v117 = vld [vmem:[#allocation5 + $0x8] sm:$0xff]
    %v118 = vld [vmem:[#allocation5 + $0x10] sm:$0xff]
    %v119 = vld [vmem:[#allocation5 + $0x18] sm:$0xff]
    %v120 = vld [vmem:[#allocation5 + $0x20] sm:$0xff]
    %v121 = vld [vmem:[#allocation5 + $0x28] sm:$0xff]
    %v122 = vld [vmem:[#allocation5 + $0x30] sm:$0xff]
    %v123 = vld [vmem:[#allocation5 + $0x38] sm:$0xff]
    %v124 = vld [vmem:[#allocation5 + $0x40] sm:$0xff]
    %v125 = vld [vmem:[#allocation5 + $0x48] sm:$0xff]
    %v126 = vld [vmem:[#allocation5 + $0x50] sm:$0xff]
    %v127 = vld [vmem:[#allocation5 + $0x58] sm:$0xff]
    %v128 = vld [vmem:[#allocation5 + $0x60] sm:$0xff]
    %v129 = vld [vmem:[#allocation5 + $0x68] sm:$0xff]
    %v130 = vld [vmem:[#allocation5 + $0x70] sm:$0xff]
    %v131 = vld [vmem:[#allocation5 + $0x78] sm:$0xff]
    %v132 = vld [vmem:[#allocation5 + $0x80] sm:$0xff]
    %v133 = vld [vmem:[#allocation5 + $0x88] sm:$0xff]
    %v134 = vld [vmem:[#allocation5 + $0x90] sm:$0xff]
    %v135 = vld [vmem:[#allocation5 + $0x98] sm:$0xff]
    %v136 = vld [vmem:[#allocation5 + $0xa0] sm:$0xff]
    %v137 = vld [vmem:[#allocation5 + $0xa8] sm:$0xff]
    %v138 = vld [vmem:[#allocation5 + $0xb0] sm:$0xff]
    %v139 = vld [vmem:[#allocation5 + $0xb8] sm:$0xff]
    %v140 = vld [vmem:[#allocation5 + $0xc0] sm:$0xff]
    %v141 = vld [vmem:[#allocation5 + $0xc8] sm:$0xff]
    %v142 = vld [vmem:[#allocation5 + $0xd0] sm:$0xff]
    %v143 = vld [vmem:[#allocation5 + $0xd8] sm:$0xff]
    %v144 = vld [vmem:[#allocation5 + $0xe0] sm:$0xff]
    %v145 = vld [vmem:[#allocation5 + $0xe8] sm:$0xff]
    %v146 = vld [vmem:[#allocation5 + $0xf0] sm:$0xff]
    %v147 = vld [vmem:[#allocation5 + $0xf8] sm:$0xff]
    %v148 = vld [vmem:[#allocation7] sm:$0x1]
    %v150 = vlaneseq
    %v151 = vshrl.u32 %v150, 7
    %v152 = vsub.s32 0, %v151
    %v153 = vrot.slane %v148, %v152
    %155 = vmatprep.subr.mxu0 0.0
    %156 = vmatpush1.msra.mxu0 %v116
    %157 = vmatprep.subr.mxu0 0.0
    %158 = vmatpush1.msra.mxu0 %v117
    %159 = vmatprep.subr.mxu0 0.0
    %160 = vmatpush1.msra.mxu0 %v118
    %161 = vmatprep.subr.mxu0 0.0
    %162 = vmatpush1.msra.mxu0 %v119
    %163 = vmatprep.subr.mxu0 0.0
    %164 = vmatpush1.msra.mxu0 %v120
    %165 = vmatprep.subr.mxu0 0.0
    %166 = vmatpush1.msra.mxu0 %v121
    %167 = vmatprep.subr.mxu0 0.0
    %168 = vmatpush1.msra.mxu0 %v122
    %169 = vmatprep.subr.mxu0 0.0
    %170 = vmatpush1.msra.mxu0 %v123
    %171 = vmatprep.subr.mxu0 0.0
    %172 = vmatpush1.msra.mxu0 %v124
    %173 = vmatprep.subr.mxu0 0.0
    %174 = vmatpush1.msra.mxu0 %v125
    %175 = vmatprep.subr.mxu0 0.0
    %176 = vmatpush1.msra.mxu0 %v126
    %177 = vmatprep.subr.mxu0 0.0
    %178 = vmatpush1.msra.mxu0 %v127
    %179 = vmatprep.subr.mxu0 0.0
    %180 = vmatpush1.msra.mxu0 %v128
    %181 = vmatprep.subr.mxu0 0.0
    %182 = vmatpush1.msra.mxu0 %v129
    %183 = vmatprep.subr.mxu0 0.0
    %184 = vmatpush1.msra.mxu0 %v130
    %185 = vmatprep.subr.mxu0 0.0
    %186 = vmatpush1.msra.mxu0 %v131
    %187 = vmatprep.subr.mxu0 0.0
    %188 = vmatpush1.msra.mxu0 %v132
    %189 = vmatprep.subr.mxu0 0.0
    %190 = vmatpush1.msra.mxu0 %v133
    %191 = vmatprep.subr.mxu0 0.0
    %192 = vmatpush1.msra.mxu0 %v134
    %193 = vmatprep.subr.mxu0 0.0
    %194 = vmatpush1.msra.mxu0 %v135
    %195 = vmatprep.subr.mxu0 0.0
    %196 = vmatpush1.msra.mxu0 %v136
    %197 = vmatprep.subr.mxu0 0.0
    %198 = vmatpush1.msra.mxu0 %v137
    %199 = vmatprep.subr.mxu0 0.0
    %200 = vmatpush1.msra.mxu0 %v138
    %201 = vmatprep.subr.mxu0 0.0
    %202 = vmatpush1.msra.mxu0 %v139
    %203 = vmatprep.subr.mxu0 0.0
    %204 = vmatpush1.msra.mxu0 %v140
    %205 = vmatprep.subr.mxu0 0.0
    %206 = vmatpush1.msra.mxu0 %v141
    %207 = vmatprep.subr.mxu0 0.0
    %208 = vmatpush1.msra.mxu0 %v142
    %209 = vmatprep.subr.mxu0 0.0
    %210 = vmatpush1.msra.mxu0 %v143
    %211 = vmatprep.subr.mxu0 0.0
    %212 = vmatpush1.msra.mxu0 %v144
    %213 = vmatprep.subr.mxu0 0.0
    %214 = vmatpush1.msra.mxu0 %v145
    %215 = vmatprep.subr.mxu0 0.0
    %216 = vmatpush1.msra.mxu0 %v146
    %217 = vmatprep.subr.mxu0 0.0
    %218 = vmatpush1.msra.mxu0 %v147
    %219 = vmatprep.mubr.f32.mxu0 %v115
    %220 = vmatmul.mubr.f32.gmra.mrb[0].mxu0 %v114
    %v221 = vpop.f32.mrb[0].mxu0
    %v222 = vadd.f32 %v153, %v221
    %v223 = vpop.f32.mrb[0].mxu0
    %224 = vdwg.mxu0
    %vm225 = vcmp.gt.f32.partialorder %v222, 0.0
    %v226 = vmin.f32 %v222, 0.0
    %v227 = vmul.f32 %v226, 1.442695
    %v228 = vpow.pop %v227
    %v229 = vsub.f32 %v228, 1.0
    %v230 = vsel %vm225, %v222, %v229
    %v231 = vld [vmem:[#allocation8] sm:$0xff]
    %v232 = vld [vmem:[#allocation8 + $0x8] sm:$0xff]
    %v233 = vld [vmem:[#allocation8 + $0x10] sm:$0xff]
    %v234 = vld [vmem:[#allocation8 + $0x18] sm:$0xff]
    %v235 = vld [vmem:[#allocation10] sm:$0x1]
    %v237 = vlaneseq
    %v238 = vshrl.u32 %v237, 7
    %v239 = vsub.s32 0, %v238
    %v240 = vrot.slane %v235, %v239
    %vm242 = vcmask 261120
    %v244 = vsel %vm242, %v230, 0
    %246 = vmatprep.subr.mxu0 0.0
    %247 = vmatpush1.msra.mxu0 %v231
    %248 = vmatprep.subr.mxu0 0.0
    %249 = vmatpush1.msra.mxu0 %v232
    %250 = vmatprep.subr.mxu0 0.0
    %251 = vmatpush1.msra.mxu0 %v233
    %252 = vmatprep.subr.mxu0 0.0
    %253 = vmatpush1.msra.mxu0 %v234
    %254 = vmatprep.subr.mxu0 0.0
    %255 = vmatpush1.msra.mxu0 0.0
    %256 = vmatprep.subr.mxu0 0.0
    %257 = vmatpush1.msra.mxu0 0.0
    %258 = vmatprep.subr.mxu0 0.0
    %259 = vmatpush1.msra.mxu0 0.0
    %260 = vmatprep.subr.mxu0 0.0
    %261 = vmatpush1.msra.mxu0 0.0
    %262 = vmatprep.subr.mxu0 0.0
    %263 = vmatpush1.msra.mxu0 0.0
    %264 = vmatprep.subr.mxu0 0.0
    %265 = vmatpush1.msra.mxu0 0.0
    %266 = vmatprep.subr.mxu0 0.0
    %267 = vmatpush1.msra.mxu0 0.0
    %268 = vmatprep.subr.mxu0 0.0
    %269 = vmatpush1.msra.mxu0 0.0
    %270 = vmatprep.subr.mxu0 0.0
    %271 = vmatpush1.msra.mxu0 0.0
    %272 = vmatprep.subr.mxu0 0.0
    %273 = vmatpush1.msra.mxu0 0.0
    %274 = vmatprep.subr.mxu0 0.0
    %275 = vmatpush1.msra.mxu0 0.0
    %276 = vmatprep.subr.mxu0 0.0
    %277 = vmatpush1.msra.mxu0 0.0
    %278 = vmatprep.subr.mxu0 0.0
    %279 = vmatpush1.msra.mxu0 0.0
    %280 = vmatprep.subr.mxu0 0.0
    %281 = vmatpush1.msra.mxu0 0.0
    %282 = vmatprep.subr.mxu0 0.0
    %283 = vmatpush1.msra.mxu0 0.0
    %284 = vmatprep.subr.mxu0 0.0
    %285 = vmatpush1.msra.mxu0 0.0
    %286 = vmatprep.subr.mxu0 0.0
    %287 = vmatpush1.msra.mxu0 0.0
    %288 = vmatprep.subr.mxu0 0.0
    %289 = vmatpush1.msra.mxu0 0.0
    %290 = vmatprep.subr.mxu0 0.0
    %291 = vmatpush1.msra.mxu0 0.0
    %292 = vmatprep.subr.mxu0 0.0
    %293 = vmatpush1.msra.mxu0 0.0
    %294 = vmatprep.subr.mxu0 0.0
    %295 = vmatpush1.msra.mxu0 0.0
    %296 = vmatprep.subr.mxu0 0.0
    %297 = vmatpush1.msra.mxu0 0.0
    %298 = vmatprep.subr.mxu0 0.0
    %299 = vmatpush1.msra.mxu0 0.0
    %300 = vmatprep.subr.mxu0 0.0
    %301 = vmatpush1.msra.mxu0 0.0
    %302 = vmatprep.subr.mxu0 0.0
    %303 = vmatpush1.msra.mxu0 0.0
    %304 = vmatprep.subr.mxu0 0.0
    %305 = vmatpush1.msra.mxu0 0.0
    %306 = vmatprep.subr.mxu0 0.0
    %307 = vmatpush1.msra.mxu0 0.0
    %308 = vmatprep.subr.mxu0 0.0
    %309 = vmatpush1.msra.mxu0 0.0
    %310 = vmatprep.mubr.f32.mxu0 0.0
    %311 = vmatmul.mubr.f32.gmra.mrb[0].mxu0 %v244
    %v312 = vpop.f32.mrb[0].mxu0
    %v313 = vadd.f32 %v240, %v312
    %v314 = vpop.f32.mrb[0].mxu0
    %315 = vdwg.mxu0
    %v316 = vld [vmem:[#allocation11] sm:$0xff]
    %v317 = vld [vmem:[#allocation11 + $0x8] sm:$0xff]
    %v318 = vld [vmem:[#allocation13] sm:$0x1]
    %v320 = vlaneseq
    %v321 = vshrl.u32 %v320, 7
    %v322 = vsub.s32 0, %v321
    %v323 = vrot.slane %v318, %v322
    %vm325 = vcmask 130048
    %v327 = vsel %vm325, %v313, 0
    %329 = vmatprep.subr.mxu0 0.0
    %330 = vmatpush1.msra.mxu0 %v316
    %331 = vmatprep.subr.mxu0 0.0
    %332 = vmatpush1.msra.mxu0 %v317
    %333 = vmatprep.subr.mxu0 0.0
    %334 = vmatpush1.msra.mxu0 0.0
    %335 = vmatprep.subr.mxu0 0.0
    %336 = vmatpush1.msra.mxu0 0.0
    %337 = vmatprep.subr.mxu0 0.0
    %338 = vmatpush1.msra.mxu0 0.0
    %339 = vmatprep.subr.mxu0 0.0
    %340 = vmatpush1.msra.mxu0 0.0
    %341 = vmatprep.subr.mxu0 0.0
    %342 = vmatpush1.msra.mxu0 0.0
    %343 = vmatprep.subr.mxu0 0.0
    %344 = vmatpush1.msra.mxu0 0.0
    %345 = vmatprep.subr.mxu0 0.0
    %346 = vmatpush1.msra.mxu0 0.0
    %347 = vmatprep.subr.mxu0 0.0
    %348 = vmatpush1.msra.mxu0 0.0
    %349 = vmatprep.subr.mxu0 0.0
    %350 = vmatpush1.msra.mxu0 0.0
    %351 = vmatprep.subr.mxu0 0.0
    %352 = vmatpush1.msra.mxu0 0.0
    %353 = vmatprep.subr.mxu0 0.0
    %354 = vmatpush1.msra.mxu0 0.0
    %355 = vmatprep.subr.mxu0 0.0
    %356 = vmatpush1.msra.mxu0 0.0
    %357 = vmatprep.subr.mxu0 0.0
    %358 = vmatpush1.msra.mxu0 0.0
    %359 = vmatprep.subr.mxu0 0.0
    %360 = vmatpush1.msra.mxu0 0.0
    %361 = vmatprep.subr.mxu0 0.0
    %362 = vmatpush1.msra.mxu0 0.0
    %363 = vmatprep.subr.mxu0 0.0
    %364 = vmatpush1.msra.mxu0 0.0
    %365 = vmatprep.subr.mxu0 0.0
    %366 = vmatpush1.msra.mxu0 0.0
    %367 = vmatprep.subr.mxu0 0.0
    %368 = vmatpush1.msra.mxu0 0.0
    %369 = vmatprep.subr.mxu0 0.0
    %370 = vmatpush1.msra.mxu0 0.0
    %371 = vmatprep.subr.mxu0 0.0
    %372 = vmatpush1.msra.mxu0 0.0
    %373 = vmatprep.subr.mxu0 0.0
    %374 = vmatpush1.msra.mxu0 0.0
    %375 = vmatprep.subr.mxu0 0.0
    %376 = vmatpush1.msra.mxu0 0.0
    %377 = vmatprep.subr.mxu0 0.0
    %378 = vmatpush1.msra.mxu0 0.0
    %379 = vmatprep.subr.mxu0 0.0
    %380 = vmatpush1.msra.mxu0 0.0
    %381 = vmatprep.subr.mxu0 0.0
    %382 = vmatpush1.msra.mxu0 0.0
    %383 = vmatprep.subr.mxu0 0.0
    %384 = vmatpush1.msra.mxu0 0.0
    %385 = vmatprep.subr.mxu0 0.0
    %386 = vmatpush1.msra.mxu0 0.0
    %387 = vmatprep.subr.mxu0 0.0
    %388 = vmatpush1.msra.mxu0 0.0
    %389 = vmatprep.subr.mxu0 0.0
    %390 = vmatpush1.msra.mxu0 0.0
    %391 = vmatprep.subr.mxu0 0.0
    %392 = vmatpush1.msra.mxu0 0.0
    %393 = vmatprep.mubr.f32.mxu0 0.0
    %394 = vmatmul.mubr.f32.gmra.mrb[0].mxu0 %v327
    %v395 = vpop.f32.mrb[0].mxu0
    %v396 = vadd.f32 %v323, %v395
    %v397 = vpop.f32.mrb[0].mxu0
    %398 = vdwg.mxu0
    %399 = vst.msk [vmem:[#allocation14] sm:$0xff] %vm242, %v396
    // Predicated region
    $region58: #{tpu_custom_call.1} parent=1 // pred_check
      _
    $region59: #{tpu_custom_call.1} parent=1 // pred_check_branch
      %401 = sbr.rel (0) target = $region61
    $region60: #{tpu_custom_call.1} parent=1 // pred_region
      %s403 = ssub.s32 128, 128
      %404 = vsyncadd [#allocation4], %s403
      %s406 = sshll.u32 [#allocation14], 4
      %s407 = int_to_ptr.vmem [resolvable:$true] %s406
      %409 = dma.vmem_to_hbm [thread:$0]  %s407, 128, %s7, [#allocation4]
    $region61: #{tpu_custom_call.1} parent=1 // pred_fallthru
      _
    // Predicated region
    $region62: #{tpu_custom_call.1} parent=1 // pred_check
      _
    $region63: #{tpu_custom_call.1} parent=1 // pred_check_branch
      %411 = sbr.rel (0) target = $region65
    $region64: #{tpu_custom_call.1} parent=1 // pred_region
      %412 = dma.done [#allocation4], 128
    $region65: #{tpu_custom_call.1} parent=1 // pred_fallthru
      _
    %413 = vsyncpa [#allocation3], 1
    %414 = vsyncpa [#allocation6], 1
    %415 = vsyncpa [#allocation9], 1
    %416 = vsyncpa [#allocation12], 1
    %417 = vsyncpa [#allocation4], 1

</llo_original>
